<compile_context>
chip_gen: v7x
topology: tpu7x:2x2x1
jax: 0.10.0
libtpu: 0.0.40
codegen_flags: <defaults>
</compile_context>

<pallas_src>
import numpy as np
import jax
import jax.numpy as jnp
from jax import lax
from jax.experimental import pallas as pl
from jax.experimental.pallas import tpu as pltpu


def zyz_kernel(p_ref, q_ref, o_ref):
    """p_ref: (n,4) [alpha,beta,gamma,delta] raw params
       q_ref: (n,4) [q0r,q0i,q1r,q1i]
       o_ref: (n,4) [o0r,o0i,o1r,o1i]"""
    two_pi = jnp.float32(2.0 * np.pi)

    # One tanh over all four packed parameter columns: tanh(t)*(4*pi)/2 + (4*pi)/2
    t = jnp.tanh(p_ref[...]) * two_pi + two_pi            # (n, 4)

    a = t[:, 0:1]
    bh = t[:, 1:2] * 0.5
    gh = t[:, 2:3] * 0.5
    dh = t[:, 3:4] * 0.5

    # Pack every angle whose cos/sin we need into one (n, 8) value:
    #   lanes 0..3 -> phases [a-b/2-d/2, a-b/2+d/2, a+b/2-d/2, a+b/2+d/2]
    #   lane  4    -> gamma/2
    #   lanes 5..7 -> unused (zero)
    lane8 = lax.broadcasted_iota(jnp.int32, (1, 8), 1)
    is_phase = (lane8 < 4).astype(jnp.float32)
    is_g = (lane8 == 4).astype(jnp.float32)
    sign_b = jnp.where(lane8 < 2, -1.0,
                       jnp.where(lane8 < 4, 1.0, 0.0)).astype(jnp.float32)
    sign_d = jnp.where(lane8 < 4,
                       jnp.where((lane8 & 1) == 0, -1.0, 1.0),
                       0.0).astype(jnp.float32)

    ang = a * is_phase + bh * sign_b + dh * sign_d + gh * is_g   # (n, 8)
    c = jnp.cos(ang)      # single EUP cos for all entries
    s = jnp.sin(ang)      # single EUP sin for all entries

    cg = c[:, 4:5]        # cos(gamma/2)
    sg = s[:, 4:5]        # sin(gamma/2)

    # Magnitude pattern per U entry [u00, u01, u10, u11] = [cg, -sg, sg, cg]
    lane4 = lax.broadcasted_iota(jnp.int32, (1, 4), 1)
    mag = jnp.where((lane4 == 0) | (lane4 == 3), cg,
                    jnp.where(lane4 == 1, -sg, sg))              # (n, 4)

    ur = c[:, 0:4] * mag     # [u00r, u01r, u10r, u11r]
    ui = s[:, 0:4] * mag     # [u00i, u01i, u10i, u11i]

    q0r = q_ref[:, 0:1]
    q0i = q_ref[:, 1:2]
    q1r = q_ref[:, 2:3]
    q1i = q_ref[:, 3:4]

    u00r, u01r, u10r, u11r = ur[:, 0:1], ur[:, 1:2], ur[:, 2:3], ur[:, 3:4]
    u00i, u01i, u10i, u11i = ui[:, 0:1], ui[:, 1:2], ui[:, 2:3], ui[:, 3:4]

    # out0 = U00*q0 + U01*q1 ; out1 = U10*q0 + U11*q1   (complex mat-vec)
    o0r = u00r * q0r - u00i * q0i + u01r * q1r - u01i * q1i
    o0i = u00r * q0i + u00i * q0r + u01r * q1i + u01i * q1r
    o1r = u10r * q0r - u10i * q0i + u11r * q1r - u11i * q1i
    o1i = u10r * q0i + u10i * q0r + u11r * q1i + u11i * q1r

    # Single whole-buffer store, columns [o0r, o0i, o1r, o1i]
    o_ref[...] = jnp.where(lane4 == 0, o0r,
                 jnp.where(lane4 == 1, o0i,
                 jnp.where(lane4 == 2, o1r, o1i)))


@jax.jit
def _apply_u_pallas(params_packed, qubits2):
    """params_packed: (n,4) float32; qubits2: (n,2) complex64 -> (n,2) complex64."""
    n = params_packed.shape[0]
    # [q0r, q0i, q1r, q1i] interleaved plane -- no transposes.
    q_f = jnp.stack([jnp.real(qubits2), jnp.imag(qubits2)], axis=-1)   # (n, 2, 2)
    q_f = q_f.reshape(n, 4).astype(jnp.float32)

    vmem = pl.BlockSpec(memory_space=pltpu.MemorySpace.VMEM)
    out = pl.pallas_call(
        zyz_kernel,
        in_specs=[vmem, vmem],
        out_specs=vmem,
        out_shape=jax.ShapeDtypeStruct((n, 4), jnp.float32),
    )(params_packed, q_f)

    out = out.reshape(n, 2, 2)
    return lax.complex(out[..., 0], out[..., 1]).astype(jnp.complex64)   # (n, 2)


class ZYZPallas:
    """JAX/Pallas equivalent of the PyTorch ZYZ module."""

    def __init__(self, n_qubits, key):
        k1, k2, k3, k4 = jax.random.split(key, 4)
        self.alpha = jax.random.normal(k1, (n_qubits,), dtype=jnp.float32)
        self.beta = jax.random.normal(k2, (n_qubits,), dtype=jnp.float32)
        self.gamma = jax.random.normal(k3, (n_qubits,), dtype=jnp.float32)
        self.delta = jax.random.normal(k4, (n_qubits,), dtype=jnp.float32)
        # Pack parameters once (hoisted out of the per-call hot path).
        self.params_packed = jnp.stack(
            [self.alpha, self.beta, self.gamma, self.delta], axis=-1
        ).astype(jnp.float32)                                   # (n, 4)

    def __call__(self, qubits, controlled=False):
        if controlled:
            # CU = block_diag(I2, U): first two components pass through unchanged,
            # last two get U applied (semantically exact vs. the PyTorch pad trick).
            passthrough = qubits[..., 0:2]
            rotated = _apply_u_pallas(self.params_packed, qubits[..., 2:4])
            return jnp.concatenate([passthrough, rotated], axis=-1)
        return _apply_u_pallas(self.params_packed, qubits)


def _reference_forward(mod, qubits):
    """Pure-JAX complex reference of the default (controlled=False) path."""
    two_pi = 2.0 * np.pi
    a = jnp.tanh(mod.alpha) * two_pi + two_pi
    b = jnp.tanh(mod.beta) * two_pi + two_pi
    g = jnp.tanh(mod.gamma) * two_pi + two_pi
    d = jnp.tanh(mod.delta) * two_pi + two_pi
    cg = jnp.cos(g / 2)
    sg = jnp.sin(g / 2)
    e00 = jnp.exp(1j * (a - b / 2 - d / 2)) * cg
    e01 = -jnp.exp(1j * (a - b / 2 + d / 2)) * sg
    e10 = jnp.exp(1j * (a + b / 2 - d / 2)) * sg
    e11 = jnp.exp(1j * (a + b / 2 + d / 2)) * cg
    U = jnp.stack(
        [jnp.stack([e00, e01], axis=-1), jnp.stack([e10, e11], axis=-1)],
        axis=-2)                                            # (n, 2, 2) complex
    return jnp.squeeze(U @ qubits[..., None], axis=-1)       # (n, 2) complex


if __name__ == "__main__":
    n_qubits = 8
    key = jax.random.PRNGKey(0)
    kparams, kre, kim = jax.random.split(key, 3)

    mod = ZYZPallas(n_qubits, kparams)

    q_re = jax.random.normal(kre, (n_qubits, 2), dtype=jnp.float32)
    q_im = jax.random.normal(kim, (n_qubits, 2), dtype=jnp.float32)
    qubits = (q_re + 1j * q_im).astype(jnp.complex64)

    out = mod(qubits)                        # default forward (controlled=False)
    out = jax.block_until_ready(out)

    ref = jax.block_until_ready(_reference_forward(mod, qubits))
    assert out.shape == (n_qubits, 2) and out.dtype == jnp.complex64
    np.testing.assert_allclose(np.asarray(out), np.asarray(ref),
                               rtol=1e-5, atol=1e-5)

    # also exercise the controlled path once
    q4 = jnp.concatenate([qubits, qubits], axis=-1)           # (n, 4) complex
    out_c = jax.block_until_ready(mod(q4, controlled=True))
    np.testing.assert_allclose(np.asarray(out_c[:, :2]), np.asarray(qubits),
                               rtol=1e-6, atol=1e-6)
    np.testing.assert_allclose(np.asarray(out_c[:, 2:]), np.asarray(ref),
                               rtol=1e-5, atol=1e-5)

    print("KERNEL_OK")
</pallas_src>

<mosaic_0001>
module attributes {stable_mosaic.version = 11 : i64} {
  func.func @zyz_kernel(%arg0: memref<8x4xf32, #tpu.memory_space<vmem>>, %arg1: memref<8x4xf32, #tpu.memory_space<vmem>>, %arg2: memref<8x4xf32, #tpu.memory_space<vmem>>) attributes {dimension_semantics = [], scalar_prefetch = 0 : i64, scratch_operands = 0 : i64, tpu.core_type = #tpu.core_type<tc>} {
    %c0 = arith.constant 0 : index
    %c0_0 = arith.constant 0 : index
    %0 = vector.load %arg0[%c0, %c0_0] : memref<8x4xf32, #tpu.memory_space<vmem>>, vector<8x4xf32>
    %1 = math.tanh %0 : vector<8x4xf32>
    %cst = arith.constant 6.28318548 : f32
    %2 = vector.broadcast %cst : f32 to vector<8x4xf32>
    %3 = arith.mulf %1, %2 : vector<8x4xf32>
    %cst_1 = arith.constant 6.28318548 : f32
    %4 = vector.broadcast %cst_1 : f32 to vector<8x4xf32>
    %5 = arith.addf %3, %4 : vector<8x4xf32>
    %6 = vector.extract_strided_slice %5 {offsets = [0, 0], sizes = [8, 1], strides = [1, 1]} : vector<8x4xf32> to vector<8x1xf32>
    %7 = vector.extract_strided_slice %5 {offsets = [0, 1], sizes = [8, 1], strides = [1, 1]} : vector<8x4xf32> to vector<8x1xf32>
    %cst_2 = arith.constant 5.000000e-01 : f32
    %8 = vector.broadcast %cst_2 : f32 to vector<8x1xf32>
    %9 = arith.mulf %7, %8 : vector<8x1xf32>
    %10 = vector.extract_strided_slice %5 {offsets = [0, 2], sizes = [8, 1], strides = [1, 1]} : vector<8x4xf32> to vector<8x1xf32>
    %cst_3 = arith.constant 5.000000e-01 : f32
    %11 = vector.broadcast %cst_3 : f32 to vector<8x1xf32>
    %12 = arith.mulf %10, %11 : vector<8x1xf32>
    %13 = vector.extract_strided_slice %5 {offsets = [0, 3], sizes = [8, 1], strides = [1, 1]} : vector<8x4xf32> to vector<8x1xf32>
    %cst_4 = arith.constant 5.000000e-01 : f32
    %14 = vector.broadcast %cst_4 : f32 to vector<8x1xf32>
    %15 = arith.mulf %13, %14 : vector<8x1xf32>
    %16 = tpu.iota {dimensions = array<i32: 1>} : vector<1x8xi32>
    %c4_i32 = arith.constant 4 : i32
    %17 = vector.broadcast %c4_i32 : i32 to vector<1x8xi32>
    %18 = arith.cmpi slt, %16, %17 : vector<1x8xi32>
    %19 = arith.extui %18 : vector<1x8xi1> to vector<1x8xi32>
    %20 = arith.sitofp %19 : vector<1x8xi32> to vector<1x8xf32>
    %c4_i32_5 = arith.constant 4 : i32
    %21 = vector.broadcast %c4_i32_5 : i32 to vector<1x8xi32>
    %22 = arith.cmpi eq, %16, %21 : vector<1x8xi32>
    %23 = arith.extui %22 : vector<1x8xi1> to vector<1x8xi32>
    %24 = arith.sitofp %23 : vector<1x8xi32> to vector<1x8xf32>
    %c2_i32 = arith.constant 2 : i32
    %25 = vector.broadcast %c2_i32 : i32 to vector<1x8xi32>
    %26 = arith.cmpi slt, %16, %25 : vector<1x8xi32>
    %c4_i32_6 = arith.constant 4 : i32
    %27 = vector.broadcast %c4_i32_6 : i32 to vector<1x8xi32>
    %28 = arith.cmpi slt, %16, %27 : vector<1x8xi32>
    %cst_7 = arith.constant 1.000000e+00 : f32
    %cst_8 = arith.constant 0.000000e+00 : f32
    %29 = vector.broadcast %cst_7 : f32 to vector<1x8xf32>
    %30 = vector.broadcast %cst_8 : f32 to vector<1x8xf32>
    %31 = arith.select %28, %29, %30 : vector<1x8xi1>, vector<1x8xf32>
    %cst_9 = arith.constant -1.000000e+00 : f32
    %32 = vector.broadcast %cst_9 : f32 to vector<1x8xf32>
    %33 = arith.select %26, %32, %31 : vector<1x8xi1>, vector<1x8xf32>
    %c4_i32_10 = arith.constant 4 : i32
    %34 = vector.broadcast %c4_i32_10 : i32 to vector<1x8xi32>
    %35 = arith.cmpi slt, %16, %34 : vector<1x8xi32>
    %c1_i32 = arith.constant 1 : i32
    %36 = vector.broadcast %c1_i32 : i32 to vector<1x8xi32>
    %37 = arith.andi %16, %36 : vector<1x8xi32>
    %c0_i32 = arith.constant 0 : i32
    %38 = vector.broadcast %c0_i32 : i32 to vector<1x8xi32>
    %39 = arith.cmpi eq, %37, %38 : vector<1x8xi32>
    %cst_11 = arith.constant -1.000000e+00 : f32
    %cst_12 = arith.constant 1.000000e+00 : f32
    %40 = vector.broadcast %cst_11 : f32 to vector<1x8xf32>
    %41 = vector.broadcast %cst_12 : f32 to vector<1x8xf32>
    %42 = arith.select %39, %40, %41 : vector<1x8xi1>, vector<1x8xf32>
    %cst_13 = arith.constant 0.000000e+00 : f32
    %43 = vector.broadcast %cst_13 : f32 to vector<1x8xf32>
    %44 = arith.select %35, %42, %43 : vector<1x8xi1>, vector<1x8xf32>
    %45 = vector.broadcast %6 : vector<8x1xf32> to vector<8x8xf32>
    %46 = vector.broadcast %20 : vector<1x8xf32> to vector<8x8xf32>
    %47 = arith.mulf %45, %46 : vector<8x8xf32>
    %48 = vector.broadcast %9 : vector<8x1xf32> to vector<8x8xf32>
    %49 = vector.broadcast %33 : vector<1x8xf32> to vector<8x8xf32>
    %50 = arith.mulf %48, %49 : vector<8x8xf32>
    %51 = arith.addf %47, %50 : vector<8x8xf32>
    %52 = vector.broadcast %15 : vector<8x1xf32> to vector<8x8xf32>
    %53 = vector.broadcast %44 : vector<1x8xf32> to vector<8x8xf32>
    %54 = arith.mulf %52, %53 : vector<8x8xf32>
    %55 = arith.addf %51, %54 : vector<8x8xf32>
    %56 = vector.broadcast %12 : vector<8x1xf32> to vector<8x8xf32>
    %57 = vector.broadcast %24 : vector<1x8xf32> to vector<8x8xf32>
    %58 = arith.mulf %56, %57 : vector<8x8xf32>
    %59 = arith.addf %55, %58 : vector<8x8xf32>
    %60 = math.cos %59 : vector<8x8xf32>
    %61 = math.sin %59 : vector<8x8xf32>
    %62 = vector.extract_strided_slice %60 {offsets = [0, 4], sizes = [8, 1], strides = [1, 1]} : vector<8x8xf32> to vector<8x1xf32>
    %63 = vector.extract_strided_slice %61 {offsets = [0, 4], sizes = [8, 1], strides = [1, 1]} : vector<8x8xf32> to vector<8x1xf32>
    %64 = tpu.iota {dimensions = array<i32: 1>} : vector<1x4xi32>
    %c0_i32_14 = arith.constant 0 : i32
    %65 = vector.broadcast %c0_i32_14 : i32 to vector<1x4xi32>
    %66 = arith.cmpi eq, %64, %65 : vector<1x4xi32>
    %c3_i32 = arith.constant 3 : i32
    %67 = vector.broadcast %c3_i32 : i32 to vector<1x4xi32>
    %68 = arith.cmpi eq, %64, %67 : vector<1x4xi32>
    %69 = arith.ori %66, %68 : vector<1x4xi1>
    %c1_i32_15 = arith.constant 1 : i32
    %70 = vector.broadcast %c1_i32_15 : i32 to vector<1x4xi32>
    %71 = arith.cmpi eq, %64, %70 : vector<1x4xi32>
    %cst_16 = arith.constant 0.000000e+00 : f32
    %72 = vector.broadcast %cst_16 : f32 to vector<8x1xf32>
    %73 = arith.subf %72, %63 : vector<8x1xf32>
    %74 = vector.shape_cast %71 : vector<1x4xi1> to vector<1x4xi1>
    %75 = vector.broadcast %74 : vector<1x4xi1> to vector<8x4xi1>
    %76 = vector.shape_cast %73 : vector<8x1xf32> to vector<8x1xf32>
    %77 = vector.broadcast %76 : vector<8x1xf32> to vector<8x4xf32>
    %78 = vector.shape_cast %63 : vector<8x1xf32> to vector<8x1xf32>
    %79 = vector.broadcast %78 : vector<8x1xf32> to vector<8x4xf32>
    %80 = arith.select %75, %77, %79 : vector<8x4xi1>, vector<8x4xf32>
    %81 = vector.shape_cast %69 : vector<1x4xi1> to vector<1x4xi1>
    %82 = vector.broadcast %81 : vector<1x4xi1> to vector<8x4xi1>
    %83 = vector.shape_cast %62 : vector<8x1xf32> to vector<8x1xf32>
    %84 = vector.broadcast %83 : vector<8x1xf32> to vector<8x4xf32>
    %85 = arith.select %82, %84, %80 : vector<8x4xi1>, vector<8x4xf32>
    %86 = vector.extract_strided_slice %60 {offsets = [0, 0], sizes = [8, 4], strides = [1, 1]} : vector<8x8xf32> to vector<8x4xf32>
    %87 = arith.mulf %86, %85 : vector<8x4xf32>
    %88 = vector.extract_strided_slice %61 {offsets = [0, 0], sizes = [8, 4], strides = [1, 1]} : vector<8x8xf32> to vector<8x4xf32>
    %89 = arith.mulf %88, %85 : vector<8x4xf32>
    %c0_17 = arith.constant 0 : index
    %c0_18 = arith.constant 0 : index
    %90 = vector.load %arg1[%c0_17, %c0_18] : memref<8x4xf32, #tpu.memory_space<vmem>>, vector<8x1xf32>
    %c0_19 = arith.constant 0 : index
    %c1 = arith.constant 1 : index
    %91 = vector.load %arg1[%c0_19, %c1] : memref<8x4xf32, #tpu.memory_space<vmem>>, vector<8x1xf32>
    %c0_20 = arith.constant 0 : index
    %c2 = arith.constant 2 : index
    %92 = vector.load %arg1[%c0_20, %c2] : memref<8x4xf32, #tpu.memory_space<vmem>>, vector<8x1xf32>
    %c0_21 = arith.constant 0 : index
    %c3 = arith.constant 3 : index
    %93 = vector.load %arg1[%c0_21, %c3] : memref<8x4xf32, #tpu.memory_space<vmem>>, vector<8x1xf32>
    %94 = vector.extract_strided_slice %87 {offsets = [0, 0], sizes = [8, 1], strides = [1, 1]} : vector<8x4xf32> to vector<8x1xf32>
    %95 = vector.extract_strided_slice %87 {offsets = [0, 1], sizes = [8, 1], strides = [1, 1]} : vector<8x4xf32> to vector<8x1xf32>
    %96 = vector.extract_strided_slice %87 {offsets = [0, 2], sizes = [8, 1], strides = [1, 1]} : vector<8x4xf32> to vector<8x1xf32>
    %97 = vector.extract_strided_slice %87 {offsets = [0, 3], sizes = [8, 1], strides = [1, 1]} : vector<8x4xf32> to vector<8x1xf32>
    %98 = vector.extract_strided_slice %89 {offsets = [0, 0], sizes = [8, 1], strides = [1, 1]} : vector<8x4xf32> to vector<8x1xf32>
    %99 = vector.extract_strided_slice %89 {offsets = [0, 1], sizes = [8, 1], strides = [1, 1]} : vector<8x4xf32> to vector<8x1xf32>
    %100 = vector.extract_strided_slice %89 {offsets = [0, 2], sizes = [8, 1], strides = [1, 1]} : vector<8x4xf32> to vector<8x1xf32>
    %101 = vector.extract_strided_slice %89 {offsets = [0, 3], sizes = [8, 1], strides = [1, 1]} : vector<8x4xf32> to vector<8x1xf32>
    %102 = arith.mulf %94, %90 : vector<8x1xf32>
    %103 = arith.mulf %98, %91 : vector<8x1xf32>
    %104 = arith.subf %102, %103 : vector<8x1xf32>
    %105 = arith.mulf %95, %92 : vector<8x1xf32>
    %106 = arith.addf %104, %105 : vector<8x1xf32>
    %107 = arith.mulf %99, %93 : vector<8x1xf32>
    %108 = arith.subf %106, %107 : vector<8x1xf32>
    %109 = arith.mulf %94, %91 : vector<8x1xf32>
    %110 = arith.mulf %98, %90 : vector<8x1xf32>
    %111 = arith.addf %109, %110 : vector<8x1xf32>
    %112 = arith.mulf %95, %93 : vector<8x1xf32>
    %113 = arith.addf %111, %112 : vector<8x1xf32>
    %114 = arith.mulf %99, %92 : vector<8x1xf32>
    %115 = arith.addf %113, %114 : vector<8x1xf32>
    %116 = arith.mulf %96, %90 : vector<8x1xf32>
    %117 = arith.mulf %100, %91 : vector<8x1xf32>
    %118 = arith.subf %116, %117 : vector<8x1xf32>
    %119 = arith.mulf %97, %92 : vector<8x1xf32>
    %120 = arith.addf %118, %119 : vector<8x1xf32>
    %121 = arith.mulf %101, %93 : vector<8x1xf32>
    %122 = arith.subf %120, %121 : vector<8x1xf32>
    %123 = arith.mulf %96, %91 : vector<8x1xf32>
    %124 = arith.mulf %100, %90 : vector<8x1xf32>
    %125 = arith.addf %123, %124 : vector<8x1xf32>
    %126 = arith.mulf %97, %93 : vector<8x1xf32>
    %127 = arith.addf %125, %126 : vector<8x1xf32>
    %128 = arith.mulf %101, %92 : vector<8x1xf32>
    %129 = arith.addf %127, %128 : vector<8x1xf32>
    %c0_i32_22 = arith.constant 0 : i32
    %130 = vector.broadcast %c0_i32_22 : i32 to vector<1x4xi32>
    %131 = arith.cmpi eq, %64, %130 : vector<1x4xi32>
    %c1_i32_23 = arith.constant 1 : i32
    %132 = vector.broadcast %c1_i32_23 : i32 to vector<1x4xi32>
    %133 = arith.cmpi eq, %64, %132 : vector<1x4xi32>
    %c2_i32_24 = arith.constant 2 : i32
    %134 = vector.broadcast %c2_i32_24 : i32 to vector<1x4xi32>
    %135 = arith.cmpi eq, %64, %134 : vector<1x4xi32>
    %136 = vector.shape_cast %135 : vector<1x4xi1> to vector<1x4xi1>
    %137 = vector.broadcast %136 : vector<1x4xi1> to vector<8x4xi1>
    %138 = vector.shape_cast %122 : vector<8x1xf32> to vector<8x1xf32>
    %139 = vector.broadcast %138 : vector<8x1xf32> to vector<8x4xf32>
    %140 = vector.shape_cast %129 : vector<8x1xf32> to vector<8x1xf32>
    %141 = vector.broadcast %140 : vector<8x1xf32> to vector<8x4xf32>
    %142 = arith.select %137, %139, %141 : vector<8x4xi1>, vector<8x4xf32>
    %143 = vector.shape_cast %133 : vector<1x4xi1> to vector<1x4xi1>
    %144 = vector.broadcast %143 : vector<1x4xi1> to vector<8x4xi1>
    %145 = vector.shape_cast %115 : vector<8x1xf32> to vector<8x1xf32>
    %146 = vector.broadcast %145 : vector<8x1xf32> to vector<8x4xf32>
    %147 = arith.select %144, %146, %142 : vector<8x4xi1>, vector<8x4xf32>
    %148 = vector.shape_cast %131 : vector<1x4xi1> to vector<1x4xi1>
    %149 = vector.broadcast %148 : vector<1x4xi1> to vector<8x4xi1>
    %150 = vector.shape_cast %108 : vector<8x1xf32> to vector<8x1xf32>
    %151 = vector.broadcast %150 : vector<8x1xf32> to vector<8x4xf32>
    %152 = arith.select %149, %151, %147 : vector<8x4xi1>, vector<8x4xf32>
    %c0_25 = arith.constant 0 : index
    %c0_26 = arith.constant 0 : index
    %153 = vector.load %arg2[%c0_25, %c0_26] : memref<8x4xf32, #tpu.memory_space<vmem>>, vector<8x4xf32>
    tpu.vector_store %arg2[%c0_25, %c0_26], %152 {strides = array<i32>} : memref<8x4xf32, #tpu.memory_space<vmem>>, vector<8x4xf32>,
    return
  }
}

</mosaic_0001>

<llo_original>
// kernel: custom-call.1
$region0: #{custom-call.1}
  %s0 = inlined_call_operand.hbm [shape: c64[8,2], index: 0, kind: input, shape index: {}]
  %s1 = inlined_call_operand.vmem [shape: f32[8,2], index: 1, kind: output, shape index: {}]
  %s2 = scalar_lea.hbm %s0, 32
  $region1: #{custom-call.1} parent=0
    #allocation0 [shape = 's32[1]{0}', space=sflag, size = 0x4, scoped, tag = 'scoped memory for custom-call.1']
    %3 = vsyncpa [#allocation0], 0
    %s4 = sshll.u32 %s1, 4
    %s5 = int_to_ptr.vmem [resolvable:$true] %s4
    %7 = dma.hbm_to_vmem [thread:$0]  %s2, 32, %s5, [#allocation0]
    %8 = dma.done [#allocation0], 32
    %9 = vsyncpa [#allocation0], 1

// kernel: custom-call
$region0: #{custom-call}
  %s0 = inlined_call_operand.hbm [shape: c64[8,2], index: 0, kind: input, shape index: {}]
  %s1 = inlined_call_operand.vmem [shape: f32[8,2], index: 1, kind: output, shape index: {}]
  $region1: #{custom-call} parent=0
    #allocation0 [shape = 's32[1]{0}', space=sflag, size = 0x4, scoped, tag = 'scoped memory for custom-call']
    %2 = vsyncpa [#allocation0], 0
    %s3 = sshll.u32 %s1, 4
    %s4 = int_to_ptr.vmem [resolvable:$true] %s3
    %6 = dma.hbm_to_vmem [thread:$0]  %s0, 32, %s4, [#allocation0]
    %7 = dma.done [#allocation0], 32
    %8 = vsyncpa [#allocation0], 1

// kernel: custom-call.2
$region0: #{custom-call.2}
  %s0 = inlined_call_operand.vmem [shape: f32[8,2], index: 0, kind: input, shape index: {}]
  %s1 = inlined_call_operand.vmem [shape: f32[8,2], index: 1, kind: input, shape index: {}]
  %s2 = inlined_call_operand.hbm [shape: c64[8,2], index: 2, kind: output, shape index: {}]
  %s3 = scalar_lea.hbm %s2, 32
  $region1: #{custom-call.2} parent=0
    #allocation0 [shape = 's32[1]{0}', space=sflag, size = 0x4, scoped, tag = 'scoped memory for custom-call.2']
    %4 = vsyncpa [#allocation0], 0
    %s5 = sshll.u32 %s0, 4
    %s6 = int_to_ptr.vmem [resolvable:$true] %s5
    %8 = dma.vmem_to_hbm [thread:$0]  %s6, 32, %s2, [#allocation0]
    %9 = dma.done [#allocation0], 32
    %10 = vsyncpa [#allocation0], 1
  $region2: #{custom-call.2} parent=0
    #allocation1 [shape = 's32[1]{0}', space=sflag, size = 0x4, scoped, tag = 'scoped memory for custom-call.2']
    %11 = vsyncpa [#allocation1], 0
    %s12 = sshll.u32 %s1, 4
    %s13 = int_to_ptr.vmem [resolvable:$true] %s12
    %15 = dma.vmem_to_hbm [thread:$0]  %s13, 32, %s3, [#allocation1]
    %16 = dma.done [#allocation1], 32
    %17 = vsyncpa [#allocation1], 1

// kernel: _apply_u_pallas.1
$region0: #{_apply_u_pallas.1}
  #allocation0 [shape = 'u32[]', space=smem, size = 0x4, offset = 0x4, fixed_abs, tag = 'smem constant byte address 0x4 - core index']
  #allocation1 [shape = 'u32[144,128]{1,0:T(1,128)}', space=vmem, size = 0x12000, scoped, tag = 'internal scratch']
  %s0 = inlined_call_operand.vmem [shape: f32[8,4], index: 0, kind: input, shape index: {}]
  %s1 = inlined_call_operand.vmem [shape: f32[8,4], index: 1, kind: input, shape index: {}]
  %s2 = inlined_call_operand.vmem [shape: f32[8,4], index: 2, kind: output, shape index: {}]
  %s3 = sld [smem:[#allocation0]]
  $region18: #{_apply_u_pallas.1} parent=0
    _
  %s5 = ssub.s32 1, %s3
  %s6 = scalar_select 0, %s5, %s3
  // Predicated region
  $region2: #{_apply_u_pallas.1} parent=0 // pred_check
    _
  $region3: #{_apply_u_pallas.1} parent=0 // pred_check_branch
    %8 = sbr.rel (0) target = $region5
  $region4: #{_apply_u_pallas.1} parent=0 // pred_region
    _
  $region5: #{_apply_u_pallas.1} parent=0 // pred_fallthru
    _
  // Predicated region
  $region6: #{_apply_u_pallas.1} parent=0 // pred_check
    _
  $region7: #{_apply_u_pallas.1} parent=0 // pred_check_branch
    %10 = sbr.rel (0) target = $region9
  $region8: #{_apply_u_pallas.1} parent=0 // pred_region
    _
  $region9: #{_apply_u_pallas.1} parent=0 // pred_fallthru
    _
  %v11 = vld [vmem:[%s0] sm:$0xff]
  %v12 = vtanh.pop %v11
  %v13 = vmul.f32 %v12, 6.2831855
  %v14 = vadd.f32 %v13, 6.2831855
  %v15 = vmul.f32 %v14, 0.5
  %v16 = vlaneseq
  %v17 = vand.u32 %v16, 127
  %vm18 = vcmp.lt.s32.totalorder %v17, 4
  %v19 = vsel %vm18, 1, 0
  %v20 = vcvt.s32.f32 %v19
  %vm21 = vcmp.eq.s32.totalorder %v17, 4
  %v22 = vsel %vm21, 1, 0
  %v23 = vcvt.s32.f32 %v22
  %vm24 = vcmp.lt.s32.totalorder %v17, 2
  %v25 = vsel %vm18, 1.0, 0.0
  %v26 = vsel %vm24, -1.0, %v25
  %v27 = vand.u32 %v17, 1
  %vm28 = vcmp.eq.s32.totalorder %v27, 0
  %v29 = vsel %vm28, -1.0, 1.0
  %v30 = vsel %vm18, %v29, 0.0
  %32 = vset.pattern.permute.xlu0 0
  %33 = vperm.xlu0 %32, %v14
  %v34 = vpop.permute.xlu0 %33
  %v36 = vmul.f32 %v34, %v20
  %38 = vset.pattern.permute.xlu0 1
  %39 = vperm.xlu0 %38, %v15
  %v40 = vpop.permute.xlu0 %39
  %v42 = vmul.f32 %v40, %v26
  %v43 = vadd.f32 %v36, %v42
  %44 = vset.pattern.permute.xlu0 3
  %45 = vperm.xlu0 %44, %v15
  %v46 = vpop.permute.xlu0 %45
  %v48 = vmul.f32 %v46, %v30
  %v49 = vadd.f32 %v43, %v48
  %50 = vset.pattern.permute.xlu0 2
  %51 = vperm.xlu0 %50, %v15
  %v52 = vpop.permute.xlu0 %51
  %v54 = vmul.f32 %v52, %v23
  %v55 = vadd.f32 %v49, %v54
  %v56 = vand.u32 2147483647, %v55
  %vm57 = vcmp.le.f32.partialorder %v56, 0.7853982
  %vm58 = vcmp.lt.s32.totalorder %v55, 0
  %v59 = vand.u32 %v55, 2139095040
  %v60 = vshrl.u32 %v59, 23
  %v61 = vsub.s32 %v60, 127
  %v62 = vand.u32 2147483647, %v55
  %v63 = vand.u32 %v62, 8388607
  %v64 = vor.u32 %v63, 8388608
  %v65 = vsub.s32 0, %v64
  %v66 = vadd.s32 %v61, 1
  %vm67 = vcmp.gt.s32.totalorder %v66, 0
  %v68 = vsel %vm67, %v66, 0
  %v69 = vshrl.u32 %v68, 5
  %v70 = vand.u32 %v68, 31
  %v71 = vsub.s32 32, %v70
  %v72 = vshrl.u32 683565275, %v71
  %v73 = vshll.u32 683565275, %v70
  %v74 = vshrl.u32 2475754826, %v71
  %v75 = vor.u32 %v73, %v74
  %v76 = vshll.u32 2475754826, %v70
  %v77 = vshrl.u32 2131351028, %v71
  %v78 = vor.u32 %v76, %v77
  %v79 = vshll.u32 2131351028, %v70
  %v80 = vshrl.u32 2102212464, %v71
  %v81 = vor.u32 %v79, %v80
  %v82 = vshll.u32 2102212464, %v70
  %v83 = vshrl.u32 920167782, %v71
  %v84 = vor.u32 %v82, %v83
  %v85 = vshll.u32 920167782, %v70
  %v86 = vshrl.u32 1326507024, %v71
  %v87 = vor.u32 %v85, %v86
  %vm88 = vcmp.lt.s32.totalorder %v69, 1
  %vm89 = vcmp.lt.s32.totalorder %v69, 2
  %vm90 = vcmp.lt.s32.totalorder %v69, 3
  %vm91 = vcmp.lt.s32.totalorder %v69, 4
  %v92 = vsel %vm88, %v72, %v75
  %v93 = vsel %vm91, %v81, 2102212464
  %v94 = vsel %vm90, %v78, %v93
  %v95 = vsel %vm89, %v92, %v94
  %v96 = vsel %vm88, %v75, %v78
  %v97 = vsel %vm91, %v84, 920167782
  %v98 = vsel %vm90, %v81, %v97
  %v99 = vsel %vm89, %v96, %v98
  %v100 = vsel %vm88, %v78, %v81
  %v101 = vsel %vm91, %v87, 1326507024
  %v102 = vsel %vm90, %v84, %v101
  %v103 = vsel %vm89, %v100, %v102
  %v104 = vshll.u32 %v64, 8
  %v105 = vmul.u32.u64.compose %v104, %v103
  %v106 = vextract.low.u32 %v105
  %v107 = vextract.high.u32 %v105
  %v108 = vmul.u32.u64.compose %v104, %v99
  %v109 = vextract.low.u32 %v108
  %v110 = vextract.high.u32 %v108
  %v111 = vmul.u32 %v104, %v95
  %v112 = vadd.s32 %v107, %v109
  %vm113 = vc.u32 %v107, %v109
  %v114 = vadd.s32 %v110, 1
  %v115 = vsel %vm113, %v114, %v110
  %v116 = vadd.s32 %v111, %v115
  %v117 = vadd.s32 %v116, 536870912
  %v118 = vshrl.u32 %v117, 30
  %v119 = vshll.u32 %v118, 30
  %v120 = vsub.s32 %v116, %v119
  %vm121 = vcmp.lt.s32.totalorder %v120, 0
  %v122 = vsub.s32 0, %v120
  %v123 = vsel %vm121, %v122, %v120
  %v124 = vclz %v123
  %v125 = vsub.s32 %v124, 2
  %vm126 = vcmp.gt.s32.totalorder 0, %v125
  %v127 = vsel %vm126, 0, %v125
  %v128 = vsub.s32 32, %v127
  %v129 = vshll.u32 %v120, %v127
  %v130 = vshrl.u32 %v112, %v128
  %v131 = vor.u32 %v129, %v130
  %v132 = vsub.s32 4294967266, %v127
  %v133 = vadd.s32 %v132, 127
  %v134 = vshll.u32 %v133, 23
  %v135 = vor.u32 4788187, %v134
  %v136 = vand.u32 2147483647, %v135
  %v138 = vcvt.s32.f32 %v131
  %v139 = vmul.f32 %v138, %v136
  %v140 = vxor.u32 %v139, 2147483648
  %v141 = vsel %vm58, %v140, %v139
  %v142 = vsub.s32 4, %v118
  %v143 = vsel %vm58, %v142, %v118
  %v144 = vsel %vm57, %v55, %v141
  %v145 = vsel %vm57, 0, %v143
  %v146 = vcosq.f32.pop %v144
  %v147 = vsinq.f32.pop %v144
  %vm148 = vweird.f32 %v55
  %v149 = vand.u32 %v145, 3
  %vm150 = vcmp.lt.s32.totalorder %v149, 2
  %vm151 = vcmp.eq.s32.totalorder %v149, 0
  %v152 = vxor.u32 %v147, 2147483648
  %v153 = vsel %vm151, %v146, %v152
  %vm154 = vcmp.eq.s32.totalorder %v149, 2
  %v155 = vxor.u32 %v146, 2147483648
  %v156 = vsel %vm154, %v155, %v147
  %v157 = vsel %vm150, %v153, %v156
  %v158 = vsel %vm148, nan, %v157
  %v159 = vand.u32 2147483647, %v55
  %vm160 = vcmp.le.f32.partialorder %v159, 0.7853982
  %vm161 = vcmp.lt.s32.totalorder %v55, 0
  %v162 = vand.u32 %v55, 2139095040
  %v163 = vshrl.u32 %v162, 23
  %v164 = vsub.s32 %v163, 127
  %v165 = vand.u32 2147483647, %v55
  %v166 = vand.u32 %v165, 8388607
  %v167 = vor.u32 %v166, 8388608
  %v168 = vsub.s32 0, %v167
  %v169 = vadd.s32 %v164, 1
  %vm170 = vcmp.gt.s32.totalorder %v169, 0
  %v171 = vsel %vm170, %v169, 0
  %v172 = vshrl.u32 %v171, 5
  %v173 = vand.u32 %v171, 31
  %v174 = vsub.s32 32, %v173
  %v175 = vshrl.u32 683565275, %v174
  %v176 = vshll.u32 683565275, %v173
  %v177 = vshrl.u32 2475754826, %v174
  %v178 = vor.u32 %v176, %v177
  %v179 = vshll.u32 2475754826, %v173
  %v180 = vshrl.u32 2131351028, %v174
  %v181 = vor.u32 %v179, %v180
  %v182 = vshll.u32 2131351028, %v173
  %v183 = vshrl.u32 2102212464, %v174
  %v184 = vor.u32 %v182, %v183
  %v185 = vshll.u32 2102212464, %v173
  %v186 = vshrl.u32 920167782, %v174
  %v187 = vor.u32 %v185, %v186
  %v188 = vshll.u32 920167782, %v173
  %v189 = vshrl.u32 1326507024, %v174
  %v190 = vor.u32 %v188, %v189
  %vm191 = vcmp.lt.s32.totalorder %v172, 1
  %vm192 = vcmp.lt.s32.totalorder %v172, 2
  %vm193 = vcmp.lt.s32.totalorder %v172, 3
  %vm194 = vcmp.lt.s32.totalorder %v172, 4
  %v195 = vsel %vm191, %v175, %v178
  %v196 = vsel %vm194, %v184, 2102212464
  %v197 = vsel %vm193, %v181, %v196
  %v198 = vsel %vm192, %v195, %v197
  %v199 = vsel %vm191, %v178, %v181
  %v200 = vsel %vm194, %v187, 920167782
  %v201 = vsel %vm193, %v184, %v200
  %v202 = vsel %vm192, %v199, %v201
  %v203 = vsel %vm191, %v181, %v184
  %v204 = vsel %vm194, %v190, 1326507024
  %v205 = vsel %vm193, %v187, %v204
  %v206 = vsel %vm192, %v203, %v205
  %v207 = vshll.u32 %v167, 8
  %v208 = vmul.u32.u64.compose %v207, %v206
  %v209 = vextract.low.u32 %v208
  %v210 = vextract.high.u32 %v208
  %v211 = vmul.u32.u64.compose %v207, %v202
  %v212 = vextract.low.u32 %v211
  %v213 = vextract.high.u32 %v211
  %v214 = vmul.u32 %v207, %v198
  %v215 = vadd.s32 %v210, %v212
  %vm216 = vc.u32 %v210, %v212
  %v217 = vadd.s32 %v213, 1
  %v218 = vsel %vm216, %v217, %v213
  %v219 = vadd.s32 %v214, %v218
  %v220 = vadd.s32 %v219, 536870912
  %v221 = vshrl.u32 %v220, 30
  %v222 = vshll.u32 %v221, 30
  %v223 = vsub.s32 %v219, %v222
  %vm224 = vcmp.lt.s32.totalorder %v223, 0
  %v225 = vsub.s32 0, %v223
  %v226 = vsel %vm224, %v225, %v223
  %v227 = vclz %v226
  %v228 = vsub.s32 %v227, 2
  %vm229 = vcmp.gt.s32.totalorder 0, %v228
  %v230 = vsel %vm229, 0, %v228
  %v231 = vsub.s32 32, %v230
  %v232 = vshll.u32 %v223, %v230
  %v233 = vshrl.u32 %v215, %v231
  %v234 = vor.u32 %v232, %v233
  %v235 = vsub.s32 4294967266, %v230
  %v236 = vadd.s32 %v235, 127
  %v237 = vshll.u32 %v236, 23
  %v238 = vor.u32 4788187, %v237
  %v239 = vand.u32 2147483647, %v238
  %v241 = vcvt.s32.f32 %v234
  %v242 = vmul.f32 %v241, %v239
  %v243 = vxor.u32 %v242, 2147483648
  %v244 = vsel %vm161, %v243, %v242
  %v245 = vsub.s32 4, %v221
  %v246 = vsel %vm161, %v245, %v221
  %v247 = vsel %vm160, %v55, %v244
  %v248 = vsel %vm160, 0, %v246
  %v249 = vcosq.f32.pop %v247
  %v250 = vsinq.f32.pop %v247
  %vm251 = vweird.f32 %v55
  %v252 = vadd.s32 %v248, 3
  %v253 = vand.u32 %v252, 3
  %vm254 = vcmp.lt.s32.totalorder %v253, 2
  %vm255 = vcmp.eq.s32.totalorder %v253, 0
  %v256 = vxor.u32 %v250, 2147483648
  %v257 = vsel %vm255, %v249, %v256
  %vm258 = vcmp.eq.s32.totalorder %v253, 2
  %v259 = vxor.u32 %v249, 2147483648
  %v260 = vsel %vm258, %v259, %v250
  %v261 = vsel %vm254, %v257, %v260
  %v262 = vsel %vm251, nan, %v261
  %vm263 = vcmp.eq.s32.totalorder %v17, 0
  %vm264 = vcmp.eq.s32.totalorder %v17, 3
  %vm265 = vmor %vm263, %vm264
  %vm266 = vcmp.eq.s32.totalorder %v17, 1
  %v267 = vsub.f32 0.0, %v262
  %v268 = vsel %vm266, 1, 0
  %vm269 = vcmp.eq.s32.totalorder %v268, 1
  %271 = vset.pattern.permute.xlu0 4
  %272 = vperm.xlu0 %271, %v267
  %v273 = vpop.permute.xlu0 %272
  %276 = vset.pattern.permute.xlu0 4
  %277 = vperm.xlu0 %276, %v262
  %v278 = vpop.permute.xlu0 %277
  %v280 = vsel %vm269, %v273, %v278
  %v281 = vsel %vm265, 1, 0
  %vm282 = vcmp.eq.s32.totalorder %v281, 1
  %284 = vset.pattern.permute.xlu0 4
  %285 = vperm.xlu0 %284, %v158
  %v286 = vpop.permute.xlu0 %285
  %v288 = vsel %vm282, %v286, %v280
  %v289 = vmul.f32 %v158, %v288
  %v290 = vmul.f32 %v262, %v288
  %v291 = vld [vmem:[%s1] sm:$0xff]
  %v292 = vmul.f32 %v289, %v291
  %294 = vrot.lane.b32.xlu0 %v291, 127
  %v295 = vpop.permute.xlu0 %294
  %v297 = vmul.f32 %v290, %v295
  %v298 = vsub.f32 %v292, %v297
  %v299 = vmul.f32 %v289, %v295
  %301 = vrot.lane.b32.xlu0 %v299, 127
  %v302 = vpop.permute.xlu0 %301
  %v304 = vadd.f32 %v298, %v302
  %305 = vrot.lane.b32.xlu0 %v291, 126
  %v306 = vpop.permute.xlu0 %305
  %v308 = vmul.f32 %v290, %v306
  %310 = vrot.lane.b32.xlu0 %v308, 127
  %v311 = vpop.permute.xlu0 %310
  %v313 = vsub.f32 %v304, %v311
  %v314 = vmul.f32 %v290, %v291
  %v315 = vadd.f32 %v299, %v314
  %v316 = vmul.f32 %v289, %v306
  %318 = vrot.lane.b32.xlu0 %v316, 127
  %v319 = vpop.permute.xlu0 %318
  %v321 = vadd.f32 %v315, %v319
  %323 = vrot.lane.b32.xlu0 %v297, 127
  %v324 = vpop.permute.xlu0 %323
  %v326 = vadd.f32 %v321, %v324
  %327 = vrot.lane.b32.xlu0 %v291, 2
  %v328 = vpop.permute.xlu0 %327
  %v330 = vmul.f32 %v289, %v328
  %331 = vrot.lane.b32.xlu0 %v291, 1
  %v332 = vpop.permute.xlu0 %331
  %v334 = vmul.f32 %v290, %v332
  %v335 = vsub.f32 %v330, %v334
  %v336 = vmul.f32 %v289, %v332
  %338 = vrot.lane.b32.xlu0 %v336, 127
  %v339 = vpop.permute.xlu0 %338
  %v341 = vadd.f32 %v335, %v339
  %343 = vrot.lane.b32.xlu0 %v314, 127
  %v344 = vpop.permute.xlu0 %343
  %v346 = vsub.f32 %v341, %v344
  %v347 = vmul.f32 %v290, %v328
  %v348 = vadd.f32 %v336, %v347
  %350 = vrot.lane.b32.xlu0 %v292, 127
  %v351 = vpop.permute.xlu0 %350
  %v353 = vadd.f32 %v348, %v351
  %355 = vrot.lane.b32.xlu0 %v334, 127
  %v356 = vpop.permute.xlu0 %355
  %v358 = vadd.f32 %v353, %v356
  %vm359 = vcmp.eq.s32.totalorder %v17, 2
  %v360 = vsel %vm359, 1, 0
  %vm361 = vcmp.eq.s32.totalorder %v360, 1
  %363 = vset.pattern.permute.xlu0 2
  %364 = vperm.xlu0 %363, %v346
  %v365 = vpop.permute.xlu0 %364
  %368 = vset.pattern.permute.xlu0 2
  %369 = vperm.xlu0 %368, %v358
  %v370 = vpop.permute.xlu0 %369
  %v372 = vsel %vm361, %v365, %v370
  %374 = vset.pattern.permute.xlu0 0
  %375 = vperm.xlu0 %374, %v326
  %v376 = vpop.permute.xlu0 %375
  %v378 = vsel %vm269, %v376, %v372
  %v379 = vsel %vm263, 1, 0
  %vm380 = vcmp.eq.s32.totalorder %v379, 1
  %382 = vset.pattern.permute.xlu0 0
  %383 = vperm.xlu0 %382, %v313
  %v384 = vpop.permute.xlu0 %383
  %v386 = vsel %vm380, %v384, %v378
  %vm387 = vcmask 31744
  %388 = vst.msk [vmem:[%s2] sm:$0xff] %vm387, %v386
  // Predicated region
  $region10: #{_apply_u_pallas.1} parent=0 // pred_check
    _
  $region11: #{_apply_u_pallas.1} parent=0 // pred_check_branch
    %390 = sbr.rel (0) target = $region13
  $region12: #{_apply_u_pallas.1} parent=0 // pred_region
    _
  $region13: #{_apply_u_pallas.1} parent=0 // pred_fallthru
    _
  // Predicated region
  $region14: #{_apply_u_pallas.1} parent=0 // pred_check
    _
  $region15: #{_apply_u_pallas.1} parent=0 // pred_check_branch
    %392 = sbr.rel (0) target = $region17
  $region16: #{_apply_u_pallas.1} parent=0 // pred_region
    _
  $region17: #{_apply_u_pallas.1} parent=0 // pred_fallthru
    _

</llo_original>
